<compile_context>
chip_gen: v7x
topology: tpu7x:2x2x1
jax: 0.10.0
libtpu: 0.0.40
codegen_flags: <defaults>
</compile_context>

<pallas_src>
import functools

import jax
import jax.numpy as jnp
from jax import lax
from jax.experimental import pallas as pl
from jax.experimental.pallas import tpu as pltpu


def _pick_tile(n, candidates):
    """Largest candidate tile that evenly divides n (falls back to n itself)."""
    for c in candidates:
        if n % c == 0:
            return c
    return n


# ----------------------------------------------------------------------------
# Kernel 1a: feature transform  XW = X @ Wp   (row-tiled, lane-dense output)
# ----------------------------------------------------------------------------
def _xw_kernel(x_ref, w_ref, out_ref):
    # x_ref: (tm, D)  w_ref: (D, Dp)  out_ref: (tm, Dp)
    out_ref[...] = jnp.dot(
        x_ref[...], w_ref[...], preferred_element_type=jnp.float32
    ).astype(out_ref.dtype)


def _xw_matmul(x, w_pad):
    N, D = x.shape
    Dp = w_pad.shape[1]
    tm = _pick_tile(N, (512, 256, 128, 64, 32, 16, 8))
    return pl.pallas_call(
        _xw_kernel,
        out_shape=jax.ShapeDtypeStruct((N, Dp), jnp.bfloat16),
        grid=(N // tm,),
        in_specs=[
            pl.BlockSpec((tm, D), lambda i: (i, 0)),
            pl.BlockSpec((D, Dp), lambda i: (0, 0)),
        ],
        out_specs=pl.BlockSpec((tm, Dp), lambda i: (i, 0)),
        compiler_params=pltpu.CompilerParams(dimension_semantics=("parallel",)),
    )(x.astype(jnp.bfloat16), w_pad.astype(jnp.bfloat16))


# ----------------------------------------------------------------------------
# Kernel 1b: K-tiled  H = act(adj @ XW + b)  with f32 accumulator scratch
# ----------------------------------------------------------------------------
def _adj_matmul_kernel(adj_ref, xw_ref, b_ref, out_ref, acc_ref, *, apply_relu):
    # adj_ref: (tm, tk) bf16   xw_ref: (tk, Dp) bf16   b_ref: (1, Dp) f32
    # out_ref: (tm, Dp) f32    acc_ref: (tm, Dp) f32 scratch
    k = pl.program_id(1)

    @pl.when(k == 0)
    def _():
        acc_ref[...] = jnp.zeros_like(acc_ref)

    acc_ref[...] += jnp.dot(
        adj_ref[...], xw_ref[...], preferred_element_type=jnp.float32
    )

    @pl.when(k == pl.num_programs(1) - 1)
    def _():
        h = acc_ref[...] + b_ref[...]
        if apply_relu:
            h = jnp.maximum(h, 0.0)
        out_ref[...] = h.astype(out_ref.dtype)


def _adj_matmul(adj_bf16, xw_bf16, b_pad, *, apply_relu):
    N = adj_bf16.shape[0]
    Dp = xw_bf16.shape[1]
    tm = _pick_tile(N, (512, 256, 128, 64, 32, 16, 8))
    tk = _pick_tile(N, (1024, 512, 256, 128, 64, 32, 16, 8))
    return pl.pallas_call(
        functools.partial(_adj_matmul_kernel, apply_relu=apply_relu),
        out_shape=jax.ShapeDtypeStruct((N, Dp), jnp.float32),
        grid=(N // tm, N // tk),
        in_specs=[
            pl.BlockSpec((tm, tk), lambda i, k: (i, k)),   # adjacency tile
            pl.BlockSpec((tk, Dp), lambda i, k: (k, 0)),   # transformed features
            pl.BlockSpec((1, Dp), lambda i, k: (0, 0)),    # bias (constant block)
        ],
        out_specs=pl.BlockSpec((tm, Dp), lambda i, k: (i, 0)),
        scratch_shapes=[pltpu.VMEM((tm, Dp), jnp.float32)],
        compiler_params=pltpu.CompilerParams(
            dimension_semantics=("parallel", "arbitrary"),
            vmem_limit_bytes=32 * 1024 * 1024,
        ),
    )(adj_bf16, xw_bf16, b_pad)


def gcn_layer(adj_bf16, x, w, b, *, apply_relu):
    """One GCN layer: act(adj @ x @ w + b), lane-padded internally to 128."""
    N, D = x.shape
    Dp = ((D + 127) // 128) * 128
    if Dp != D:
        w_pad = jnp.pad(w, ((0, 0), (0, Dp - D)))
        b_pad = jnp.pad(b, ((0, 0), (0, Dp - D)))
    else:
        w_pad, b_pad = w, b
    xw = _xw_matmul(x, w_pad)                                   # (N, Dp) bf16
    h = _adj_matmul(adj_bf16, xw, b_pad.astype(jnp.float32),
                    apply_relu=apply_relu)                      # (N, Dp) f32
    return h[:, :D] if Dp != D else h


# ----------------------------------------------------------------------------
# Kernel 2: row gather  out[i, :] = memory[index[i], :]
#   memory stays in HBM (pl.ANY); only the B requested rows are DMA'd (async,
#   all copies in flight before any wait).  Equivalent of torch.index_select.
# ----------------------------------------------------------------------------
def _gather_kernel(idx_ref, mem_ref, out_ref, sems):
    # idx_ref: (B,) int32 in SMEM   mem_ref: (N, D) in HBM   out_ref: (B, D) VMEM
    B = out_ref.shape[0]
    N = mem_ref.shape[0]

    def issue(i, carry):
        row = jnp.minimum(jnp.maximum(idx_ref[i], 0), N - 1)  # clamp: no silent OOB
        pltpu.make_async_copy(
            mem_ref.at[pl.ds(row, 1), :],
            out_ref.at[pl.ds(i, 1), :],
            sems.at[i],
        ).start()
        return carry

    lax.fori_loop(0, B, issue, 0, unroll=True)

    def wait(i, carry):
        pltpu.make_async_copy(
            mem_ref.at[pl.ds(0, 1), :],
            out_ref.at[pl.ds(i, 1), :],
            sems.at[i],
        ).wait()
        return carry

    lax.fori_loop(0, B, wait, 0, unroll=True)


def gather_rows(memory, indices):
    N, D = memory.shape
    B = indices.shape[0]
    return pl.pallas_call(
        _gather_kernel,
        out_shape=jax.ShapeDtypeStruct((B, D), memory.dtype),
        in_specs=[
            pl.BlockSpec(memory_space=pltpu.MemorySpace.SMEM),  # indices (scalars)
            pl.BlockSpec(memory_space=pl.ANY),                  # U_and_V stays in HBM
        ],
        out_specs=pl.BlockSpec(memory_space=pltpu.MemorySpace.VMEM),
        scratch_shapes=[pltpu.SemaphoreType.DMA((B,))],
    )(indices.astype(jnp.int32), memory)


# ----------------------------------------------------------------------------
# GNN module (JAX wrapper; glue only — hot paths are in the kernels above)
# ----------------------------------------------------------------------------
class GNNPallas:
    def __init__(self, num_users, num_items, emb_size, key):
        self.num_users = num_users
        self.num_items = num_items
        N = num_users + num_items
        k_emb, k_w1, k_w2 = jax.random.split(key, 3)
        # nn.Embedding(num_users + num_items, emb_size) — deterministic synthetic init
        self.user_item_emb = 0.1 * jax.random.normal(k_emb, (N, emb_size), jnp.float32)
        # 2-layer GCN encoder params
        self.w1 = 0.1 * jax.random.normal(k_w1, (emb_size, emb_size), jnp.float32)
        self.b1 = jnp.zeros((1, emb_size), jnp.float32)
        self.w2 = 0.1 * jax.random.normal(k_w2, (emb_size, emb_size), jnp.float32)
        self.b2 = jnp.zeros((1, emb_size), jnp.float32)
        self.U_and_V = None

    def graph_convolution(self, all_adj):
        # user_item_index = arange(N); embedding lookup of all rows == the full table
        adj_bf16 = all_adj.astype(jnp.bfloat16)  # bandwidth-bound operand -> bf16 once
        emb = self.user_item_emb
        h1 = gcn_layer(adj_bf16, emb, self.w1, self.b1, apply_relu=True)
        self.U_and_V = gcn_layer(adj_bf16, h1, self.w2, self.b2, apply_relu=False)
        return self.U_and_V

    def forward(self, users, items, neg_items=None, training=False):
        B = users.shape[0]
        if training:
            idx = jnp.concatenate(
                [users, items + self.num_users, neg_items + self.num_users]
            ).astype(jnp.int32)
            g = gather_rows(self.U_and_V, idx)      # one fused gather, split after
            return g[:B], g[B:2 * B], g[2 * B:]
        idx = jnp.concatenate([users, items + self.num_users]).astype(jnp.int32)
        g = gather_rows(self.U_and_V, idx)
        return g[:B], g[B:]


def _build_normalized_adj(num_users, num_items, key):
    """Symmetric normalized adjacency of a random bipartite graph + self loops."""
    N = num_users + num_items
    r = (jax.random.uniform(key, (num_users, num_items)) < 0.1).astype(jnp.float32)
    top = jnp.concatenate([jnp.zeros((num_users, num_users)), r], axis=1)
    bot = jnp.concatenate([r.T, jnp.zeros((num_items, num_items))], axis=1)
    adj = jnp.concatenate([top, bot], axis=0) + jnp.eye(N, dtype=jnp.float32)
    deg = jnp.sum(adj, axis=1)
    d_inv_sqrt = 1.0 / jnp.sqrt(jnp.maximum(deg, 1e-12))
    return adj * d_inv_sqrt[:, None] * d_inv_sqrt[None, :]


if __name__ == "__main__":
    num_users, num_items, emb_size = 64, 64, 32
    batch = 8

    root = jax.random.PRNGKey(0)
    k_model, k_adj, k_u, k_i, k_n = jax.random.split(root, 5)

    model = GNNPallas(num_users, num_items, emb_size, k_model)
    all_adj = _build_normalized_adj(num_users, num_items, k_adj)

    users = jax.random.randint(k_u, (batch,), 0, num_users, dtype=jnp.int32)
    items = jax.random.randint(k_i, (batch,), 0, num_items, dtype=jnp.int32)
    neg_items = jax.random.randint(k_n, (batch,), 0, num_items, dtype=jnp.int32)

    # graph convolution (GCN encoder) — Pallas kernels
    uv = model.graph_convolution(all_adj)
    # forward (training branch, returns (u, v, neg_v)) — fused Pallas DMA gather
    u, v, neg_v = model.forward(users, items, neg_items, training=True)
    jax.block_until_ready((uv, u, v, neg_v))

    # Correctness check against a plain-JAX f32 reference of the same math.
    # (Kernel uses bf16 adjacency/features with f32 accumulation -> looser tolerance.)
    h1_ref = jnp.maximum(all_adj @ model.user_item_emb @ model.w1 + model.b1, 0.0)
    uv_ref = all_adj @ h1_ref @ model.w2 + model.b2
    assert jnp.allclose(uv, uv_ref, atol=5e-3, rtol=5e-2)
    # Gather must be an exact row copy of the kernel's own encoder output.
    assert jnp.allclose(u, uv[users], atol=1e-6)
    assert jnp.allclose(v, uv[items + num_users], atol=1e-6)
    assert jnp.allclose(neg_v, uv[neg_items + num_users], atol=1e-6)

    print("KERNEL_OK")
</pallas_src>

<mosaic_0001>
module attributes {stable_mosaic.version = 11 : i64} {
  func.func @_xw_kernel(%arg0: i32, %arg1: memref<128x32xbf16, #tpu.memory_space<vmem>>, %arg2: memref<32x128xbf16, #tpu.memory_space<vmem>>, %arg3: memref<128x128xbf16, #tpu.memory_space<vmem>>) attributes {dimension_semantics = [#tpu.dimension_semantics<parallel>], iteration_bounds = array<i64: 1>, scalar_prefetch = 0 : i64, scratch_operands = 0 : i64, tpu.core_type = #tpu.core_type<tc>, window_params = [{transform_indices = @transform_0, window_bounds = array<i64: 128, 32>}, {pipeline_mode = #tpu.pipeline_mode<synchronous>, transform_indices = @transform_1, window_bounds = array<i64: 32, 128>}, {transform_indices = @transform_2, window_bounds = array<i64: 128, 128>}]} {
    %c0 = arith.constant 0 : index
    %c0_0 = arith.constant 0 : index
    %0 = vector.load %arg1[%c0, %c0_0] : memref<128x32xbf16, #tpu.memory_space<vmem>>, vector<128x32xbf16>
    %c0_1 = arith.constant 0 : index
    %c0_2 = arith.constant 0 : index
    %1 = vector.load %arg2[%c0_1, %c0_2] : memref<32x128xbf16, #tpu.memory_space<vmem>>, vector<32x128xbf16>
    %cst = arith.constant dense<0.000000e+00> : vector<128x128xf32>
    %2 = tpu.matmul %0, %1, %cst {dimension_numbers = #tpu.dot_dimension_numbers<[1], [0], [0], [1], [0, 0, 1, 1], [], []>} : vector<128x32xbf16>, vector<32x128xbf16>, vector<128x128xf32> -> vector<128x128xf32>
    %3 = arith.truncf %2 : vector<128x128xf32> to vector<128x128xbf16>
    %c0_3 = arith.constant 0 : index
    %c0_4 = arith.constant 0 : index
    %4 = vector.load %arg3[%c0_3, %c0_4] : memref<128x128xbf16, #tpu.memory_space<vmem>>, vector<128x128xbf16>
    tpu.vector_store %arg3[%c0_3, %c0_4], %3 {strides = array<i32>} : memref<128x128xbf16, #tpu.memory_space<vmem>>, vector<128x128xbf16>,
    return
  }
  func.func @transform_0(%arg0: i32) -> (i32, i32) {
    %c0_i32 = arith.constant 0 : i32
    %c0_i32_0 = arith.constant 0 : i32
    return %arg0, %c0_i32 : i32, i32
  }
  func.func @transform_1(%arg0: i32) -> (i32, i32) {
    %c0_i32 = arith.constant 0 : i32
    %c0_i32_0 = arith.constant 0 : i32
    %c0_i32_1 = arith.constant 0 : i32
    return %c0_i32, %c0_i32_0 : i32, i32
  }
  func.func @transform_2(%arg0: i32) -> (i32, i32) {
    %c0_i32 = arith.constant 0 : i32
    %c0_i32_0 = arith.constant 0 : i32
    return %arg0, %c0_i32 : i32, i32
  }
}

</mosaic_0001>

<llo_original>
// kernel: tpu_custom_call.1
$region0: #{tpu_custom_call.1}
  #allocation0 [shape = 'u32[]', space=smem, size = 0x4, offset = 0x4, fixed_abs, tag = 'smem constant byte address 0x4 - core index']
  #allocation1 [shape = 'u32[144,128]{1,0:T(1,128)}', space=vmem, size = 0x12000, scoped, tag = 'internal scratch']
  %s0 = inlined_call_operand.vmem [shape: bf16[128,32], index: 0, kind: input, shape index: {}]
  %s1 = inlined_call_operand.vmem [shape: bf16[32,128], index: 1, kind: input, shape index: {}]
  %s2 = inlined_call_operand.hbm [shape: bf16[128,128], index: 2, kind: output, shape index: {}]
  %s3 = sld [smem:[#allocation0]]
  $region18: #{tpu_custom_call.1} parent=0
    _
  %s5 = ssub.s32 1, %s3
  %s6 = scalar_select 0, %s5, %s3
  $region1: #{tpu_custom_call.1} parent=0
    #allocation2 [shape = 'u8[32768]{0}', space=vmem, size = 0x8000, scoped, tag = 'output window, operand 0, single buffered']
    #allocation3 [shape = 's32[1]{0}', space=sflag, size = 0x4, scoped, tag = 'scoped memory for tpu_custom_call.1']
    %7 = vsyncpa [#allocation3], 0
    // Predicated region
    $region2: #{tpu_custom_call.1} parent=1 // pred_check
      _
    $region3: #{tpu_custom_call.1} parent=1 // pred_check_branch
      %9 = sbr.rel (0) target = $region5
    $region4: #{tpu_custom_call.1} parent=1 // pred_region
      _
    $region5: #{tpu_custom_call.1} parent=1 // pred_fallthru
      _
    // Predicated region
    $region6: #{tpu_custom_call.1} parent=1 // pred_check
      _
    $region7: #{tpu_custom_call.1} parent=1 // pred_check_branch
      %11 = sbr.rel (0) target = $region9
    $region8: #{tpu_custom_call.1} parent=1 // pred_region
      _
    $region9: #{tpu_custom_call.1} parent=1 // pred_fallthru
      _
    %v13 = vld [vmem:[%s0] sm:$0xf]
    %v14 = vld [vmem:[%s0 + $0x4] sm:$0xf]
    %v15 = vld [vmem:[%s0 + $0x8] sm:$0xf]
    %v16 = vld [vmem:[%s0 + $0xc] sm:$0xf]
    %v17 = vld [vmem:[%s0 + $0x10] sm:$0xf]
    %v18 = vld [vmem:[%s0 + $0x14] sm:$0xf]
    %v19 = vld [vmem:[%s0 + $0x18] sm:$0xf]
    %v20 = vld [vmem:[%s0 + $0x1c] sm:$0xf]
    %v21 = vld [vmem:[%s0 + $0x20] sm:$0xf]
    %v22 = vld [vmem:[%s0 + $0x24] sm:$0xf]
    %v23 = vld [vmem:[%s0 + $0x28] sm:$0xf]
    %v24 = vld [vmem:[%s0 + $0x2c] sm:$0xf]
    %v25 = vld [vmem:[%s0 + $0x30] sm:$0xf]
    %v26 = vld [vmem:[%s0 + $0x34] sm:$0xf]
    %v27 = vld [vmem:[%s0 + $0x38] sm:$0xf]
    %v28 = vld [vmem:[%s0 + $0x3c] sm:$0xf]
    %v29 = vld [vmem:[%s1] sm:$0xf]
    %v30 = vld [vmem:[%s1 + $0x4] sm:$0xf]
    %v31 = vld [vmem:[%s1 + $0x8] sm:$0xf]
    %v32 = vld [vmem:[%s1 + $0xc] sm:$0xf]
    %v49 = vunpack.c.l.b16 %v13
    %v50 = vunpack.c.l.b16 %v14
    %v51 = vunpack.c.l.b16 %v15
    %v52 = vunpack.c.l.b16 %v16
    %v53 = vunpack.c.l.b16 %v17
    %v54 = vunpack.c.l.b16 %v18
    %v55 = vunpack.c.l.b16 %v19
    %v56 = vunpack.c.l.b16 %v20
    %v57 = vunpack.c.l.b16 %v21
    %v58 = vunpack.c.l.b16 %v22
    %v59 = vunpack.c.l.b16 %v23
    %v60 = vunpack.c.l.b16 %v24
    %v61 = vunpack.c.l.b16 %v25
    %v62 = vunpack.c.l.b16 %v26
    %v63 = vunpack.c.l.b16 %v27
    %v64 = vunpack.c.l.b16 %v28
    %v65 = vpack.c.b16 %v50, %v49
    %v66 = vpack.c.b16 %v52, %v51
    %v67 = vpack.c.b16 %v54, %v53
    %v68 = vpack.c.b16 %v56, %v55
    %v69 = vpack.c.b16 %v58, %v57
    %v70 = vpack.c.b16 %v60, %v59
    %v71 = vpack.c.b16 %v62, %v61
    %v72 = vpack.c.b16 %v64, %v63
    %v77 = vunpack.c.l.b16 %v29
    %v78 = vunpack.c.l.b16 %v30
    %v79 = vunpack.c.l.b16 %v31
    %v80 = vunpack.c.l.b16 %v32
    %v81 = vpack.c.b16 %v78, %v77
    %v82 = vpack.c.b16 %v80, %v79
    %vm85 = vcmask 261120
    %v87 = vsel %vm85, %v65, 0
    %v90 = vsel %vm85, %v66, 0
    %v93 = vsel %vm85, %v67, 0
    %v96 = vsel %vm85, %v68, 0
    %v99 = vsel %vm85, %v69, 0
    %v102 = vsel %vm85, %v70, 0
    %v105 = vsel %vm85, %v71, 0
    %v108 = vsel %vm85, %v72, 0
    %110 = vmatprep.subr.bf16.mxu0 0
    %111 = vmatpush1.bf16.msra.mxu0 %v81
    %112 = vmatprep.subr.bf16.mxu0 0
    %113 = vmatpush1.bf16.msra.mxu0 %v82
    %114 = vmatprep.subr.bf16.mxu0 0
    %115 = vmatpush1.bf16.msra.mxu0 0
    %116 = vmatprep.subr.bf16.mxu0 0
    %117 = vmatpush1.bf16.msra.mxu0 0
    %118 = vmatprep.subr.bf16.mxu0 0
    %119 = vmatpush1.bf16.msra.mxu0 0
    %120 = vmatprep.subr.bf16.mxu0 0
    %121 = vmatpush1.bf16.msra.mxu0 0
    %122 = vmatprep.subr.bf16.mxu0 0
    %123 = vmatpush1.bf16.msra.mxu0 0
    %124 = vmatprep.subr.bf16.mxu0 0
    %125 = vmatpush1.bf16.msra.mxu0 0
    %126 = vmatprep.subr.bf16.mxu0 0
    %127 = vmatpush1.bf16.msra.mxu0 0
    %128 = vmatprep.subr.bf16.mxu0 0
    %129 = vmatpush1.bf16.msra.mxu0 0
    %130 = vmatprep.subr.bf16.mxu0 0
    %131 = vmatpush1.bf16.msra.mxu0 0
    %132 = vmatprep.subr.bf16.mxu0 0
    %133 = vmatpush1.bf16.msra.mxu0 0
    %134 = vmatprep.subr.bf16.mxu0 0
    %135 = vmatpush1.bf16.msra.mxu0 0
    %136 = vmatprep.subr.bf16.mxu0 0
    %137 = vmatpush1.bf16.msra.mxu0 0
    %138 = vmatprep.subr.bf16.mxu0 0
    %139 = vmatpush1.bf16.msra.mxu0 0
    %140 = vmatprep.subr.bf16.mxu0 0
    %141 = vmatpush1.bf16.msra.mxu0 0
    %142 = vmatprep.mubr.bf16.mxu0 0
    %143 = vmatmul.mubr.bf16.gmra.mrb[0].mxu0 %v87
    %v144 = vpop.f32.mrb[0].mxu0
    %v145 = vadd.f32 0.0, %v144
    %v146 = vpop.f32.mrb[0].mxu0
    %v147 = vpop.f32.mrb[0].mxu0
    %v148 = vadd.f32 0.0, %v147
    %v149 = vpop.f32.mrb[0].mxu0
    %150 = vmatprep.mubr.bf16.mxu0 0
    %151 = vmatmul.mubr.bf16.gmra.mrb[0].mxu0 %v90
    %v152 = vpop.f32.mrb[0].mxu0
    %v153 = vadd.f32 0.0, %v152
    %v154 = vpop.f32.mrb[0].mxu0
    %v155 = vpop.f32.mrb[0].mxu0
    %v156 = vadd.f32 0.0, %v155
    %v157 = vpop.f32.mrb[0].mxu0
    %158 = vmatprep.mubr.bf16.mxu0 0
    %159 = vmatmul.mubr.bf16.gmra.mrb[0].mxu0 %v93
    %v160 = vpop.f32.mrb[0].mxu0
    %v161 = vadd.f32 0.0, %v160
    %v162 = vpop.f32.mrb[0].mxu0
    %v163 = vpop.f32.mrb[0].mxu0
    %v164 = vadd.f32 0.0, %v163
    %v165 = vpop.f32.mrb[0].mxu0
    %166 = vmatprep.mubr.bf16.mxu0 0
    %167 = vmatmul.mubr.bf16.gmra.mrb[0].mxu0 %v96
    %v168 = vpop.f32.mrb[0].mxu0
    %v169 = vadd.f32 0.0, %v168
    %v170 = vpop.f32.mrb[0].mxu0
    %v171 = vpop.f32.mrb[0].mxu0
    %v172 = vadd.f32 0.0, %v171
    %v173 = vpop.f32.mrb[0].mxu0
    %174 = vmatprep.mubr.bf16.mxu0 0
    %175 = vmatmul.mubr.bf16.gmra.mrb[0].mxu0 %v99
    %v176 = vpop.f32.mrb[0].mxu0
    %v177 = vadd.f32 0.0, %v176
    %v178 = vpop.f32.mrb[0].mxu0
    %v179 = vpop.f32.mrb[0].mxu0
    %v180 = vadd.f32 0.0, %v179
    %v181 = vpop.f32.mrb[0].mxu0
    %182 = vmatprep.mubr.bf16.mxu0 0
    %183 = vmatmul.mubr.bf16.gmra.mrb[0].mxu0 %v102
    %v184 = vpop.f32.mrb[0].mxu0
    %v185 = vadd.f32 0.0, %v184
    %v186 = vpop.f32.mrb[0].mxu0
    %v187 = vpop.f32.mrb[0].mxu0
    %v188 = vadd.f32 0.0, %v187
    %v189 = vpop.f32.mrb[0].mxu0
    %190 = vmatprep.mubr.bf16.mxu0 0
    %191 = vmatmul.mubr.bf16.gmra.mrb[0].mxu0 %v105
    %v192 = vpop.f32.mrb[0].mxu0
    %v193 = vadd.f32 0.0, %v192
    %v194 = vpop.f32.mrb[0].mxu0
    %v195 = vpop.f32.mrb[0].mxu0
    %v196 = vadd.f32 0.0, %v195
    %v197 = vpop.f32.mrb[0].mxu0
    %198 = vmatprep.mubr.bf16.mxu0 0
    %199 = vmatmul.mubr.bf16.gmra.mrb[0].mxu0 %v108
    %v200 = vpop.f32.mrb[0].mxu0
    %v201 = vadd.f32 0.0, %v200
    %v202 = vpop.f32.mrb[0].mxu0
    %v203 = vpop.f32.mrb[0].mxu0
    %v204 = vadd.f32 0.0, %v203
    %v205 = vpop.f32.mrb[0].mxu0
    %206 = vdwg.mxu0
    %v207 = vpack.c.bf16 %v148, %v145
    %v208 = vpack.c.bf16 %v156, %v153
    %v209 = vpack.c.bf16 %v164, %v161
    %v210 = vpack.c.bf16 %v172, %v169
    %v211 = vpack.c.bf16 %v180, %v177
    %v212 = vpack.c.bf16 %v188, %v185
    %v213 = vpack.c.bf16 %v196, %v193
    %v214 = vpack.c.bf16 %v204, %v201
    %v223 = vunpack.c.l.b16 %v207
    %v224 = vunpack.c.h.b16 %v207
    %v225 = vunpack.c.l.b16 %v208
    %v226 = vunpack.c.h.b16 %v208
    %v227 = vunpack.c.l.b16 %v209
    %v228 = vunpack.c.h.b16 %v209
    %v229 = vunpack.c.l.b16 %v210
    %v230 = vunpack.c.h.b16 %v210
    %v231 = vunpack.c.l.b16 %v211
    %v232 = vunpack.c.h.b16 %v211
    %v233 = vunpack.c.l.b16 %v212
    %v234 = vunpack.c.h.b16 %v212
    %v235 = vunpack.c.l.b16 %v213
    %v236 = vunpack.c.h.b16 %v213
    %v237 = vunpack.c.l.b16 %v214
    %v238 = vunpack.c.h.b16 %v214
    %v239 = vpack.c.b16 %v223, %v223
    %v240 = vpack.c.b16 %v224, %v224
    %v241 = vpack.c.b16 %v225, %v225
    %v242 = vpack.c.b16 %v226, %v226
    %v243 = vpack.c.b16 %v227, %v227
    %v244 = vpack.c.b16 %v228, %v228
    %v245 = vpack.c.b16 %v229, %v229
    %v246 = vpack.c.b16 %v230, %v230
    %v247 = vpack.c.b16 %v231, %v231
    %v248 = vpack.c.b16 %v232, %v232
    %v249 = vpack.c.b16 %v233, %v233
    %v250 = vpack.c.b16 %v234, %v234
    %v251 = vpack.c.b16 %v235, %v235
    %v252 = vpack.c.b16 %v236, %v236
    %v253 = vpack.c.b16 %v237, %v237
    %v254 = vpack.c.b16 %v238, %v238
    %271 = vst [vmem:[#allocation2] sm:$0xf] %v239
    %272 = vst [vmem:[#allocation2 + $0x4] sm:$0xf] %v240
    %273 = vst [vmem:[#allocation2 + $0x8] sm:$0xf] %v241
    %274 = vst [vmem:[#allocation2 + $0xc] sm:$0xf] %v242
    %275 = vst [vmem:[#allocation2 + $0x10] sm:$0xf] %v243
    %276 = vst [vmem:[#allocation2 + $0x14] sm:$0xf] %v244
    %277 = vst [vmem:[#allocation2 + $0x18] sm:$0xf] %v245
    %278 = vst [vmem:[#allocation2 + $0x1c] sm:$0xf] %v246
    %279 = vst [vmem:[#allocation2 + $0x20] sm:$0xf] %v247
    %280 = vst [vmem:[#allocation2 + $0x24] sm:$0xf] %v248
    %281 = vst [vmem:[#allocation2 + $0x28] sm:$0xf] %v249
    %282 = vst [vmem:[#allocation2 + $0x2c] sm:$0xf] %v250
    %283 = vst [vmem:[#allocation2 + $0x30] sm:$0xf] %v251
    %284 = vst [vmem:[#allocation2 + $0x34] sm:$0xf] %v252
    %285 = vst [vmem:[#allocation2 + $0x38] sm:$0xf] %v253
    %286 = vst [vmem:[#allocation2 + $0x3c] sm:$0xf] %v254
    // Predicated region
    $region10: #{tpu_custom_call.1} parent=1 // pred_check
      _
    $region11: #{tpu_custom_call.1} parent=1 // pred_check_branch
      %288 = sbr.rel (0) target = $region13
    $region12: #{tpu_custom_call.1} parent=1 // pred_region
      %s290 = ssub.s32 1024, 1024
      %291 = vsyncadd [#allocation3], %s290
      %s292 = sshll.u32 [#allocation2], 4
      %s293 = int_to_ptr.vmem [resolvable:$true] %s292
      %298 = dma.vmem_to_hbm [thread:$0]  %s293, 1024, %s2, [#allocation3], 64, 64, 4
    $region13: #{tpu_custom_call.1} parent=1 // pred_fallthru
      _
    // Predicated region
    $region14: #{tpu_custom_call.1} parent=1 // pred_check
      _
    $region15: #{tpu_custom_call.1} parent=1 // pred_check_branch
      %300 = sbr.rel (0) target = $region17
    $region16: #{tpu_custom_call.1} parent=1 // pred_region
      %301 = dma.done [#allocation3], 1024
    $region17: #{tpu_custom_call.1} parent=1 // pred_fallthru
      _
    %302 = vsyncpa [#allocation3], 1

</llo_original>
